<compile_context>
chip_gen: v6e
topology: v6e:2x2x1
jax: 0.10.0
libtpu: 0.0.40
codegen_flags: <defaults>
</compile_context>

<pallas_src>
import functools

import jax
import jax.numpy as jnp
from jax.experimental import pallas as pl
from jax.experimental.pallas import tpu as pltpu


def _round_up(x: int, m: int) -> int:
    return (x + m - 1) // m * m


def _cdiv(a: int, b: int) -> int:
    return -(-a // b)


def _mlp_kernel(x_ref, w1_ref, b1_ref, w2_ref, b2_ref, w3_ref, b3_ref, o_ref):
    # Three fused matmul + bias + ReLU stages, all in f32 (MXU accumulates f32).
    x = x_ref[...]

    h = jnp.dot(x, w1_ref[...], preferred_element_type=jnp.float32) + b1_ref[...]
    h = jnp.maximum(h, 0.0)

    h = jnp.dot(h, w2_ref[...], preferred_element_type=jnp.float32) + b2_ref[...]
    h = jnp.maximum(h, 0.0)

    h = jnp.dot(h, w3_ref[...], preferred_element_type=jnp.float32) + b3_ref[...]
    h = jnp.maximum(h, 0.0)

    o_ref[...] = h.astype(o_ref.dtype)


@functools.partial(jax.jit, static_argnames=("tile_b_max",))
def tabular_model_forward(x, params, *, tile_b_max=8192):
    """Fused MLP forward. x: (B, input_dim) float32 -> (B, 16) float32."""
    w1, b1, w2, b2, w3, b3 = params
    B, in_dim = x.shape
    out_dim = w3.shape[1]

    # --- batch tiling -------------------------------------------------------
    # Large tiles amortize per-grid-step overhead; for batches that allow it,
    # force an even grid of length >= 2 so v7x's two TensorCores both get work.
    num_tiles = max(_cdiv(B, tile_b_max), 1)
    if B >= 16:
        num_tiles = max(num_tiles, 2)
        if num_tiles % 2:
            num_tiles += 1
    tile_b = _round_up(_cdiv(B, num_tiles), 8)   # sublane-aligned
    B_pad = tile_b * num_tiles

    xp = x if B_pad == B else jnp.pad(x, ((0, B_pad - B), (0, 0)))

    # --- block specs --------------------------------------------------------
    # x / out: batch-tiled, last dim equals the full array dim (no lane padding
    # needed -> minimal HBM traffic).  Weights / biases: whole-array blocks with
    # a constant index_map, so they are VMEM-resident across the grid.
    x_spec = pl.BlockSpec((tile_b, in_dim), lambda i: (i, 0))
    out_spec = pl.BlockSpec((tile_b, out_dim), lambda i: (i, 0))
    resident = lambda a: pl.BlockSpec(a.shape, lambda i: (0, 0))

    out_padded = pl.pallas_call(
        _mlp_kernel,
        out_shape=jax.ShapeDtypeStruct((B_pad, out_dim), jnp.float32),
        grid=(num_tiles,),
        in_specs=[
            x_spec,
            resident(w1), resident(b1),
            resident(w2), resident(b2),
            resident(w3), resident(b3),
        ],
        out_specs=out_spec,
        compiler_params=pltpu.CompilerParams(
            dimension_semantics=("parallel",),
            # Double-buffered x/out + f32 intermediates ~0.75 KiB/row; at the
            # 8192-row cap that's ~6 MiB, comfortably under this limit on
            # v5e (16 MiB default scoped), v6e and v7x (64 MiB physical).
            vmem_limit_bytes=48 * 1024 * 1024,
        ),
    )(xp, w1, b1, w2, b2, w3, b3)

    return out_padded[:B] if B_pad != B else out_padded


def init_params(key, input_dim, embedding_dim=64):
    """Deterministic synthetic parameters matching TabularModel's layer shapes."""
    dims = [(input_dim, embedding_dim), (embedding_dim, 32), (32, 16)]
    params = []
    for fan_in, fan_out in dims:
        key, kw, kb = jax.random.split(key, 3)
        bound = 1.0 / jnp.sqrt(fan_in)
        w = jax.random.uniform(kw, (fan_in, fan_out), jnp.float32, -bound, bound)
        b = jax.random.uniform(kb, (1, fan_out), jnp.float32, -bound, bound)
        params += [w, b]
    return tuple(params)


def reference_forward(x, params):
    """Pure-JAX float32 reference mirroring the PyTorch forward."""
    w1, b1, w2, b2, w3, b3 = params
    h = jnp.maximum(jnp.dot(x, w1) + b1, 0.0)
    h = jnp.maximum(jnp.dot(h, w2) + b2, 0.0)
    return jnp.maximum(jnp.dot(h, w3) + b3, 0.0)


if __name__ == "__main__":
    key = jax.random.PRNGKey(0)
    key, kx = jax.random.split(key)

    batch, input_dim, embedding_dim = 8, 20, 64
    x = jax.random.normal(kx, (batch, input_dim), jnp.float32)
    params = init_params(key, input_dim, embedding_dim)

    out = tabular_model_forward(x, params)
    out = jax.block_until_ready(out)

    ref = reference_forward(x, params)
    assert out.shape == (batch, 16), out.shape
    # Both paths use the TPU MXU's default matmul precision; tolerance covers
    # the small difference in rounding order between fused and unfused layers.
    assert jnp.allclose(out, ref, atol=2e-2, rtol=2e-2), "mismatch vs reference"

    print("KERNEL_OK")
</pallas_src>

<mosaic_0001>
module attributes {stable_mosaic.version = 11 : i64} {
  func.func @_mlp_kernel(%arg0: i32, %arg1: memref<8x20xf32, #tpu.memory_space<vmem>>, %arg2: memref<20x64xf32, #tpu.memory_space<vmem>>, %arg3: memref<1x64xf32, #tpu.memory_space<vmem>>, %arg4: memref<64x32xf32, #tpu.memory_space<vmem>>, %arg5: memref<1x32xf32, #tpu.memory_space<vmem>>, %arg6: memref<32x16xf32, #tpu.memory_space<vmem>>, %arg7: memref<1x16xf32, #tpu.memory_space<vmem>>, %arg8: memref<8x16xf32, #tpu.memory_space<vmem>>) attributes {dimension_semantics = [#tpu.dimension_semantics<parallel>], iteration_bounds = array<i64: 1>, scalar_prefetch = 0 : i64, scratch_operands = 0 : i64, tpu.core_type = #tpu.core_type<tc>, window_params = [{transform_indices = @transform_0, window_bounds = array<i64: 8, 20>}, {pipeline_mode = #tpu.pipeline_mode<synchronous>, transform_indices = @transform_1, window_bounds = array<i64: 20, 64>}, {pipeline_mode = #tpu.pipeline_mode<synchronous>, transform_indices = @transform_2, window_bounds = array<i64: 1, 64>}, {pipeline_mode = #tpu.pipeline_mode<synchronous>, transform_indices = @transform_3, window_bounds = array<i64: 64, 32>}, {pipeline_mode = #tpu.pipeline_mode<synchronous>, transform_indices = @transform_4, window_bounds = array<i64: 1, 32>}, {pipeline_mode = #tpu.pipeline_mode<synchronous>, transform_indices = @transform_5, window_bounds = array<i64: 32, 16>}, {pipeline_mode = #tpu.pipeline_mode<synchronous>, transform_indices = @transform_6, window_bounds = array<i64: 1, 16>}, {transform_indices = @transform_7, window_bounds = array<i64: 8, 16>}]} {
    %c0 = arith.constant 0 : index
    %c0_0 = arith.constant 0 : index
    %0 = vector.load %arg1[%c0, %c0_0] : memref<8x20xf32, #tpu.memory_space<vmem>>, vector<8x20xf32>
    %c0_1 = arith.constant 0 : index
    %c0_2 = arith.constant 0 : index
    %1 = vector.load %arg2[%c0_1, %c0_2] : memref<20x64xf32, #tpu.memory_space<vmem>>, vector<20x64xf32>
    %cst = arith.constant dense<0.000000e+00> : vector<8x64xf32>
    %2 = tpu.matmul %0, %1, %cst {dimension_numbers = #tpu.dot_dimension_numbers<[1], [0], [0], [1], [0, 0, 1, 1], [], []>} : vector<8x20xf32>, vector<20x64xf32>, vector<8x64xf32> -> vector<8x64xf32>
    %c0_3 = arith.constant 0 : index
    %c0_4 = arith.constant 0 : index
    %3 = vector.load %arg3[%c0_3, %c0_4] : memref<1x64xf32, #tpu.memory_space<vmem>>, vector<1x64xf32>
    %4 = vector.broadcast %3 : vector<1x64xf32> to vector<8x64xf32>
    %5 = arith.addf %2, %4 : vector<8x64xf32>
    %cst_5 = arith.constant 0.000000e+00 : f32
    %6 = vector.broadcast %cst_5 : f32 to vector<8x64xf32>
    %7 = arith.maximumf %5, %6 : vector<8x64xf32>
    %c0_6 = arith.constant 0 : index
    %c0_7 = arith.constant 0 : index
    %8 = vector.load %arg4[%c0_6, %c0_7] : memref<64x32xf32, #tpu.memory_space<vmem>>, vector<64x32xf32>
    %cst_8 = arith.constant dense<0.000000e+00> : vector<8x32xf32>
    %9 = tpu.matmul %7, %8, %cst_8 {dimension_numbers = #tpu.dot_dimension_numbers<[1], [0], [0], [1], [0, 0, 1, 1], [], []>} : vector<8x64xf32>, vector<64x32xf32>, vector<8x32xf32> -> vector<8x32xf32>
    %c0_9 = arith.constant 0 : index
    %c0_10 = arith.constant 0 : index
    %10 = vector.load %arg5[%c0_9, %c0_10] : memref<1x32xf32, #tpu.memory_space<vmem>>, vector<1x32xf32>
    %11 = vector.broadcast %10 : vector<1x32xf32> to vector<8x32xf32>
    %12 = arith.addf %9, %11 : vector<8x32xf32>
    %cst_11 = arith.constant 0.000000e+00 : f32
    %13 = vector.broadcast %cst_11 : f32 to vector<8x32xf32>
    %14 = arith.maximumf %12, %13 : vector<8x32xf32>
    %c0_12 = arith.constant 0 : index
    %c0_13 = arith.constant 0 : index
    %15 = vector.load %arg6[%c0_12, %c0_13] : memref<32x16xf32, #tpu.memory_space<vmem>>, vector<32x16xf32>
    %cst_14 = arith.constant dense<0.000000e+00> : vector<8x16xf32>
    %16 = tpu.matmul %14, %15, %cst_14 {dimension_numbers = #tpu.dot_dimension_numbers<[1], [0], [0], [1], [0, 0, 1, 1], [], []>} : vector<8x32xf32>, vector<32x16xf32>, vector<8x16xf32> -> vector<8x16xf32>
    %c0_15 = arith.constant 0 : index
    %c0_16 = arith.constant 0 : index
    %17 = vector.load %arg7[%c0_15, %c0_16] : memref<1x16xf32, #tpu.memory_space<vmem>>, vector<1x16xf32>
    %18 = vector.broadcast %17 : vector<1x16xf32> to vector<8x16xf32>
    %19 = arith.addf %16, %18 : vector<8x16xf32>
    %cst_17 = arith.constant 0.000000e+00 : f32
    %20 = vector.broadcast %cst_17 : f32 to vector<8x16xf32>
    %21 = arith.maximumf %19, %20 : vector<8x16xf32>
    %c0_18 = arith.constant 0 : index
    %c0_19 = arith.constant 0 : index
    %22 = vector.load %arg8[%c0_18, %c0_19] : memref<8x16xf32, #tpu.memory_space<vmem>>, vector<8x16xf32>
    tpu.vector_store %arg8[%c0_18, %c0_19], %21 {strides = array<i32>} : memref<8x16xf32, #tpu.memory_space<vmem>>, vector<8x16xf32>,
    return
  }
  func.func @transform_0(%arg0: i32) -> (i32, i32) {
    %c0_i32 = arith.constant 0 : i32
    %c0_i32_0 = arith.constant 0 : i32
    return %arg0, %c0_i32 : i32, i32
  }
  func.func @transform_1(%arg0: i32) -> (i32, i32) {
    %c0_i32 = arith.constant 0 : i32
    %c0_i32_0 = arith.constant 0 : i32
    %c0_i32_1 = arith.constant 0 : i32
    return %c0_i32, %c0_i32_0 : i32, i32
  }
  func.func @transform_2(%arg0: i32) -> (i32, i32) {
    %c0_i32 = arith.constant 0 : i32
    %c0_i32_0 = arith.constant 0 : i32
    %c0_i32_1 = arith.constant 0 : i32
    return %c0_i32, %c0_i32_0 : i32, i32
  }
  func.func @transform_3(%arg0: i32) -> (i32, i32) {
    %c0_i32 = arith.constant 0 : i32
    %c0_i32_0 = arith.constant 0 : i32
    %c0_i32_1 = arith.constant 0 : i32
    return %c0_i32, %c0_i32_0 : i32, i32
  }
  func.func @transform_4(%arg0: i32) -> (i32, i32) {
    %c0_i32 = arith.constant 0 : i32
    %c0_i32_0 = arith.constant 0 : i32
    %c0_i32_1 = arith.constant 0 : i32
    return %c0_i32, %c0_i32_0 : i32, i32
  }
  func.func @transform_5(%arg0: i32) -> (i32, i32) {
    %c0_i32 = arith.constant 0 : i32
    %c0_i32_0 = arith.constant 0 : i32
    %c0_i32_1 = arith.constant 0 : i32
    return %c0_i32, %c0_i32_0 : i32, i32
  }
  func.func @transform_6(%arg0: i32) -> (i32, i32) {
    %c0_i32 = arith.constant 0 : i32
    %c0_i32_0 = arith.constant 0 : i32
    %c0_i32_1 = arith.constant 0 : i32
    return %c0_i32, %c0_i32_0 : i32, i32
  }
  func.func @transform_7(%arg0: i32) -> (i32, i32) {
    %c0_i32 = arith.constant 0 : i32
    %c0_i32_0 = arith.constant 0 : i32
    return %arg0, %c0_i32 : i32, i32
  }
}

</mosaic_0001>

<llo_original>
// kernel: tabular_model_forward.1
$region0: #{tabular_model_forward.1}
  #allocation0 [shape = 'u32[]', space=smem, size = 0x4, offset = 0x4, fixed_abs, tag = 'smem constant byte address 0x4 - core index']
  #allocation1 [shape = 'u32[144,128]{1,0:T(1,128)}', space=vmem, size = 0x12000, scoped, tag = 'internal scratch']
  %s0 = inlined_call_operand.vmem [shape: f32[8,20], index: 0, kind: input, shape index: {}]
  %s1 = inlined_call_operand.vmem [shape: f32[20,64], index: 1, kind: input, shape index: {}]
  %s2 = inlined_call_operand.vmem [shape: f32[1,64], index: 2, kind: input, shape index: {}]
  %s3 = inlined_call_operand.vmem [shape: f32[64,32], index: 3, kind: input, shape index: {}]
  %s4 = inlined_call_operand.vmem [shape: f32[1,32], index: 4, kind: input, shape index: {}]
  %s5 = inlined_call_operand.vmem [shape: f32[32,16], index: 5, kind: input, shape index: {}]
  %s6 = inlined_call_operand.vmem [shape: f32[1,16], index: 6, kind: input, shape index: {}]
  %s7 = inlined_call_operand.hbm [shape: f32[8,16], index: 7, kind: output, shape index: {}]
  %s8 = sld [smem:[#allocation0]]
  $region38: #{tabular_model_forward.1} parent=0
    _
  %s10 = ssub.s32 1, %s8
  %s11 = scalar_select 0, %s10, %s8
  $region1: #{tabular_model_forward.1} parent=0
    #allocation2 [shape = 'u8[4096]{0}', space=vmem, size = 0x1000, scoped, tag = 'output window, operand 0, single buffered']
    #allocation3 [shape = 's32[1]{0}', space=sflag, size = 0x4, scoped, tag = 'scoped memory for tabular_model_forward.1']
    %12 = vsyncpa [#allocation3], 0
    // Predicated region
    $region2: #{tabular_model_forward.1} parent=1 // pred_check
      _
    $region3: #{tabular_model_forward.1} parent=1 // pred_check_branch
      %14 = sbr.rel (0) target = $region5
    $region4: #{tabular_model_forward.1} parent=1 // pred_region
      _
    $region5: #{tabular_model_forward.1} parent=1 // pred_fallthru
      _
    // Predicated region
    $region6: #{tabular_model_forward.1} parent=1 // pred_check
      _
    $region7: #{tabular_model_forward.1} parent=1 // pred_check_branch
      %16 = sbr.rel (0) target = $region9
    $region8: #{tabular_model_forward.1} parent=1 // pred_region
      _
    $region9: #{tabular_model_forward.1} parent=1 // pred_fallthru
      _
    // Predicated region
    $region10: #{tabular_model_forward.1} parent=1 // pred_check
      _
    $region11: #{tabular_model_forward.1} parent=1 // pred_check_branch
      %18 = sbr.rel (0) target = $region13
    $region12: #{tabular_model_forward.1} parent=1 // pred_region
      _
    $region13: #{tabular_model_forward.1} parent=1 // pred_fallthru
      _
    // Predicated region
    $region14: #{tabular_model_forward.1} parent=1 // pred_check
      _
    $region15: #{tabular_model_forward.1} parent=1 // pred_check_branch
      %20 = sbr.rel (0) target = $region17
    $region16: #{tabular_model_forward.1} parent=1 // pred_region
      _
    $region17: #{tabular_model_forward.1} parent=1 // pred_fallthru
      _
    // Predicated region
    $region18: #{tabular_model_forward.1} parent=1 // pred_check
      _
    $region19: #{tabular_model_forward.1} parent=1 // pred_check_branch
      %22 = sbr.rel (0) target = $region21
    $region20: #{tabular_model_forward.1} parent=1 // pred_region
      _
    $region21: #{tabular_model_forward.1} parent=1 // pred_fallthru
      _
    // Predicated region
    $region22: #{tabular_model_forward.1} parent=1 // pred_check
      _
    $region23: #{tabular_model_forward.1} parent=1 // pred_check_branch
      %24 = sbr.rel (0) target = $region25
    $region24: #{tabular_model_forward.1} parent=1 // pred_region
      _
    $region25: #{tabular_model_forward.1} parent=1 // pred_fallthru
      _
    // Predicated region
    $region26: #{tabular_model_forward.1} parent=1 // pred_check
      _
    $region27: #{tabular_model_forward.1} parent=1 // pred_check_branch
      %26 = sbr.rel (0) target = $region29
    $region28: #{tabular_model_forward.1} parent=1 // pred_region
      _
    $region29: #{tabular_model_forward.1} parent=1 // pred_fallthru
      _
    %v27 = vld [vmem:[%s0] sm:$0xff]
    %v28 = vld [vmem:[%s1] sm:$0xff]
    %v29 = vld [vmem:[%s1 + $0x8] sm:$0xff]
    %v30 = vld [vmem:[%s1 + $0x10] sm:$0xf]
    %v31 = vld [vmem:[%s2] sm:$0x1]
    %v33 = vlaneseq
    %v34 = vshrl.u32 %v33, 7
    %v35 = vsub.s32 0, %v34
    %v36 = vrot.slane %v31, %v35
    %vm38 = vcmask 162816
    %v40 = vsel %vm38, %v27, 0
    %vm42 = vcmask 1043456
    %v44 = vsel %vm42, %v30, 0
    %46 = vmatprep.subr.mxu0 0.0
    %47 = vmatpush1.msra.mxu0 0.0
    %48 = vmatprep.subr.mxu0 0.0
    %49 = vmatpush1.msra.mxu0 0.0
    %50 = vmatprep.subr.mxu0 0.0
    %51 = vmatpush1.msra.mxu0 0.0
    %52 = vmatprep.subr.mxu0 0.0
    %53 = vmatpush1.msra.mxu0 0.0
    %54 = vmatprep.subr.mxu0 0.0
    %55 = vmatpush1.msra.mxu0 0.0
    %56 = vmatprep.subr.mxu0 0.0
    %57 = vmatpush1.msra.mxu0 0.0
    %58 = vmatprep.subr.mxu0 0.0
    %59 = vmatpush1.msra.mxu0 0.0
    %60 = vmatprep.subr.mxu0 0.0
    %61 = vmatpush1.msra.mxu0 0.0
    %62 = vmatprep.subr.mxu0 0.0
    %63 = vmatpush1.msra.mxu0 0.0
    %64 = vmatprep.subr.mxu0 0.0
    %65 = vmatpush1.msra.mxu0 0.0
    %66 = vmatprep.subr.mxu0 0.0
    %67 = vmatpush1.msra.mxu0 0.0
    %68 = vmatprep.subr.mxu0 0.0
    %69 = vmatpush1.msra.mxu0 0.0
    %70 = vmatprep.subr.mxu0 0.0
    %71 = vmatpush1.msra.mxu0 0.0
    %72 = vmatprep.subr.mxu0 0.0
    %73 = vmatpush1.msra.mxu0 %v44
    %74 = vmatprep.subr.mxu0 0.0
    %75 = vmatpush1.msra.mxu0 %v29
    %76 = vmatprep.subr.mxu0 0.0
    %77 = vmatpush1.msra.mxu0 %v28
    %78 = vmatprep.subr.mxu0 0.0
    %79 = vmatpush2.msra.mxu0 0.0
    %80 = vmatprep.subr.mxu0 0.0
    %81 = vmatpush2.msra.mxu0 0.0
    %82 = vmatprep.subr.mxu0 0.0
    %83 = vmatpush2.msra.mxu0 0.0
    %84 = vmatprep.subr.mxu0 0.0
    %85 = vmatpush2.msra.mxu0 0.0
    %86 = vmatprep.subr.mxu0 0.0
    %87 = vmatpush2.msra.mxu0 0.0
    %88 = vmatprep.subr.mxu0 0.0
    %89 = vmatpush2.msra.mxu0 0.0
    %90 = vmatprep.subr.mxu0 0.0
    %91 = vmatpush2.msra.mxu0 0.0
    %92 = vmatprep.subr.mxu0 0.0
    %93 = vmatpush2.msra.mxu0 0.0
    %94 = vmatprep.subr.mxu0 0.0
    %95 = vmatpush2.msra.mxu0 0.0
    %96 = vmatprep.subr.mxu0 0.0
    %97 = vmatpush2.msra.mxu0 0.0
    %98 = vmatprep.subr.mxu0 0.0
    %99 = vmatpush2.msra.mxu0 0.0
    %100 = vmatprep.subr.mxu0 0.0
    %101 = vmatpush2.msra.mxu0 0.0
    %102 = vmatprep.subr.mxu0 0.0
    %103 = vmatpush2.msra.mxu0 0.0
    %104 = vmatprep.subr.mxu0 0.0
    %105 = vmatpush2.msra.mxu0 0.0
    %106 = vmatprep.subr.mxu0 0.0
    %107 = vmatpush2.msra.mxu0 0.0
    %108 = vmatprep.subr.mxu0 0.0
    %109 = vmatpush2.msra.mxu0 0.0
    %110 = vmatprep.mubr.f32.mxu0 0.0
    %111 = vmatmul.mubr.f32.gmra.mxu0 %v40
    %v112 = vpop.f32.mrf.mxu0
    %v113 = vadd.f32 %v36, %v112
    %v114 = vpop.f32.mrf.mxu0
    %115 = vdwg.mxu0
    %v116 = vmax.f32 %v113, 0.0
    %v117 = vld [vmem:[%s3] sm:$0xff]
    %v118 = vld [vmem:[%s3 + $0x8] sm:$0xff]
    %v119 = vld [vmem:[%s3 + $0x10] sm:$0xff]
    %v120 = vld [vmem:[%s3 + $0x18] sm:$0xff]
    %v121 = vld [vmem:[%s3 + $0x20] sm:$0xff]
    %v122 = vld [vmem:[%s3 + $0x28] sm:$0xff]
    %v123 = vld [vmem:[%s3 + $0x30] sm:$0xff]
    %v124 = vld [vmem:[%s3 + $0x38] sm:$0xff]
    %v125 = vld [vmem:[%s4] sm:$0x1]
    %v127 = vlaneseq
    %v128 = vshrl.u32 %v127, 7
    %v129 = vsub.s32 0, %v128
    %v130 = vrot.slane %v125, %v129
    %vm132 = vcmask 523264
    %v134 = vsel %vm132, %v116, 0
    %136 = vmatprep.subr.mxu0 0.0
    %137 = vmatpush1.msra.mxu0 0.0
    %138 = vmatprep.subr.mxu0 0.0
    %139 = vmatpush1.msra.mxu0 0.0
    %140 = vmatprep.subr.mxu0 0.0
    %141 = vmatpush1.msra.mxu0 0.0
    %142 = vmatprep.subr.mxu0 0.0
    %143 = vmatpush1.msra.mxu0 0.0
    %144 = vmatprep.subr.mxu0 0.0
    %145 = vmatpush1.msra.mxu0 0.0
    %146 = vmatprep.subr.mxu0 0.0
    %147 = vmatpush1.msra.mxu0 0.0
    %148 = vmatprep.subr.mxu0 0.0
    %149 = vmatpush1.msra.mxu0 0.0
    %150 = vmatprep.subr.mxu0 0.0
    %151 = vmatpush1.msra.mxu0 0.0
    %152 = vmatprep.subr.mxu0 0.0
    %153 = vmatpush1.msra.mxu0 %v124
    %154 = vmatprep.subr.mxu0 0.0
    %155 = vmatpush1.msra.mxu0 %v123
    %156 = vmatprep.subr.mxu0 0.0
    %157 = vmatpush1.msra.mxu0 %v122
    %158 = vmatprep.subr.mxu0 0.0
    %159 = vmatpush1.msra.mxu0 %v121
    %160 = vmatprep.subr.mxu0 0.0
    %161 = vmatpush1.msra.mxu0 %v120
    %162 = vmatprep.subr.mxu0 0.0
    %163 = vmatpush1.msra.mxu0 %v119
    %164 = vmatprep.subr.mxu0 0.0
    %165 = vmatpush1.msra.mxu0 %v118
    %166 = vmatprep.subr.mxu0 0.0
    %167 = vmatpush1.msra.mxu0 %v117
    %168 = vmatprep.subr.mxu0 0.0
    %169 = vmatpush2.msra.mxu0 0.0
    %170 = vmatprep.subr.mxu0 0.0
    %171 = vmatpush2.msra.mxu0 0.0
    %172 = vmatprep.subr.mxu0 0.0
    %173 = vmatpush2.msra.mxu0 0.0
    %174 = vmatprep.subr.mxu0 0.0
    %175 = vmatpush2.msra.mxu0 0.0
    %176 = vmatprep.subr.mxu0 0.0
    %177 = vmatpush2.msra.mxu0 0.0
    %178 = vmatprep.subr.mxu0 0.0
    %179 = vmatpush2.msra.mxu0 0.0
    %180 = vmatprep.subr.mxu0 0.0
    %181 = vmatpush2.msra.mxu0 0.0
    %182 = vmatprep.subr.mxu0 0.0
    %183 = vmatpush2.msra.mxu0 0.0
    %184 = vmatprep.subr.mxu0 0.0
    %185 = vmatpush2.msra.mxu0 0.0
    %186 = vmatprep.subr.mxu0 0.0
    %187 = vmatpush2.msra.mxu0 0.0
    %188 = vmatprep.subr.mxu0 0.0
    %189 = vmatpush2.msra.mxu0 0.0
    %190 = vmatprep.subr.mxu0 0.0
    %191 = vmatpush2.msra.mxu0 0.0
    %192 = vmatprep.subr.mxu0 0.0
    %193 = vmatpush2.msra.mxu0 0.0
    %194 = vmatprep.subr.mxu0 0.0
    %195 = vmatpush2.msra.mxu0 0.0
    %196 = vmatprep.subr.mxu0 0.0
    %197 = vmatpush2.msra.mxu0 0.0
    %198 = vmatprep.subr.mxu0 0.0
    %199 = vmatpush2.msra.mxu0 0.0
    %200 = vmatprep.mubr.f32.mxu0 0.0
    %201 = vmatmul.mubr.f32.gmra.mxu0 %v134
    %v202 = vpop.f32.mrf.mxu0
    %v203 = vadd.f32 %v130, %v202
    %v204 = vpop.f32.mrf.mxu0
    %205 = vdwg.mxu0
    %v206 = vmax.f32 %v203, 0.0
    %v207 = vld [vmem:[%s5] sm:$0xff]
    %v208 = vld [vmem:[%s5 + $0x8] sm:$0xff]
    %v209 = vld [vmem:[%s5 + $0x10] sm:$0xff]
    %v210 = vld [vmem:[%s5 + $0x18] sm:$0xff]
    %v211 = vld [vmem:[%s6] sm:$0x1]
    %v213 = vlaneseq
    %v214 = vshrl.u32 %v213, 7
    %v215 = vsub.s32 0, %v214
    %v216 = vrot.slane %v211, %v215
    %vm218 = vcmask 261120
    %v220 = vsel %vm218, %v206, 0
    %222 = vmatprep.subr.mxu0 0.0
    %223 = vmatpush1.msra.mxu0 0.0
    %224 = vmatprep.subr.mxu0 0.0
    %225 = vmatpush1.msra.mxu0 0.0
    %226 = vmatprep.subr.mxu0 0.0
    %227 = vmatpush1.msra.mxu0 0.0
    %228 = vmatprep.subr.mxu0 0.0
    %229 = vmatpush1.msra.mxu0 0.0
    %230 = vmatprep.subr.mxu0 0.0
    %231 = vmatpush1.msra.mxu0 0.0
    %232 = vmatprep.subr.mxu0 0.0
    %233 = vmatpush1.msra.mxu0 0.0
    %234 = vmatprep.subr.mxu0 0.0
    %235 = vmatpush1.msra.mxu0 0.0
    %236 = vmatprep.subr.mxu0 0.0
    %237 = vmatpush1.msra.mxu0 0.0
    %238 = vmatprep.subr.mxu0 0.0
    %239 = vmatpush1.msra.mxu0 0.0
    %240 = vmatprep.subr.mxu0 0.0
    %241 = vmatpush1.msra.mxu0 0.0
    %242 = vmatprep.subr.mxu0 0.0
    %243 = vmatpush1.msra.mxu0 0.0
    %244 = vmatprep.subr.mxu0 0.0
    %245 = vmatpush1.msra.mxu0 0.0
    %246 = vmatprep.subr.mxu0 0.0
    %247 = vmatpush1.msra.mxu0 %v210
    %248 = vmatprep.subr.mxu0 0.0
    %249 = vmatpush1.msra.mxu0 %v209
    %250 = vmatprep.subr.mxu0 0.0
    %251 = vmatpush1.msra.mxu0 %v208
    %252 = vmatprep.subr.mxu0 0.0
    %253 = vmatpush1.msra.mxu0 %v207
    %254 = vmatprep.subr.mxu0 0.0
    %255 = vmatpush2.msra.mxu0 0.0
    %256 = vmatprep.subr.mxu0 0.0
    %257 = vmatpush2.msra.mxu0 0.0
    %258 = vmatprep.subr.mxu0 0.0
    %259 = vmatpush2.msra.mxu0 0.0
    %260 = vmatprep.subr.mxu0 0.0
    %261 = vmatpush2.msra.mxu0 0.0
    %262 = vmatprep.subr.mxu0 0.0
    %263 = vmatpush2.msra.mxu0 0.0
    %264 = vmatprep.subr.mxu0 0.0
    %265 = vmatpush2.msra.mxu0 0.0
    %266 = vmatprep.subr.mxu0 0.0
    %267 = vmatpush2.msra.mxu0 0.0
    %268 = vmatprep.subr.mxu0 0.0
    %269 = vmatpush2.msra.mxu0 0.0
    %270 = vmatprep.subr.mxu0 0.0
    %271 = vmatpush2.msra.mxu0 0.0
    %272 = vmatprep.subr.mxu0 0.0
    %273 = vmatpush2.msra.mxu0 0.0
    %274 = vmatprep.subr.mxu0 0.0
    %275 = vmatpush2.msra.mxu0 0.0
    %276 = vmatprep.subr.mxu0 0.0
    %277 = vmatpush2.msra.mxu0 0.0
    %278 = vmatprep.subr.mxu0 0.0
    %279 = vmatpush2.msra.mxu0 0.0
    %280 = vmatprep.subr.mxu0 0.0
    %281 = vmatpush2.msra.mxu0 0.0
    %282 = vmatprep.subr.mxu0 0.0
    %283 = vmatpush2.msra.mxu0 0.0
    %284 = vmatprep.subr.mxu0 0.0
    %285 = vmatpush2.msra.mxu0 0.0
    %286 = vmatprep.mubr.f32.mxu0 0.0
    %287 = vmatmul.mubr.f32.gmra.mxu0 %v220
    %v288 = vpop.f32.mrf.mxu0
    %v289 = vadd.f32 %v216, %v288
    %v290 = vpop.f32.mrf.mxu0
    %291 = vdwg.mxu0
    %v292 = vmax.f32 %v289, 0.0
    %vm293 = vcmask 130048
    %294 = vst.msk [vmem:[#allocation2] sm:$0xff] %vm293, %v292
    // Predicated region
    $region30: #{tabular_model_forward.1} parent=1 // pred_check
      _
    $region31: #{tabular_model_forward.1} parent=1 // pred_check_branch
      %296 = sbr.rel (0) target = $region33
    $region32: #{tabular_model_forward.1} parent=1 // pred_region
      %s298 = ssub.s32 128, 128
      %299 = vsyncadd [#allocation3], %s298
      %s301 = sshll.u32 [#allocation2], 4
      %s302 = int_to_ptr.vmem [resolvable:$true] %s301
      %304 = dma.vmem_to_hbm [thread:$0]  %s302, 128, %s7, [#allocation3]
    $region33: #{tabular_model_forward.1} parent=1 // pred_fallthru
      _
    // Predicated region
    $region34: #{tabular_model_forward.1} parent=1 // pred_check
      _
    $region35: #{tabular_model_forward.1} parent=1 // pred_check_branch
      %306 = sbr.rel (0) target = $region37
    $region36: #{tabular_model_forward.1} parent=1 // pred_region
      %307 = dma.done [#allocation3], 128
    $region37: #{tabular_model_forward.1} parent=1 // pred_fallthru
      _
    %308 = vsyncpa [#allocation3], 1

</llo_original>
